<compile_context>
chip_gen: v7x
topology: tpu7x:2x2x1
jax: 0.10.0
libtpu: 0.0.40
codegen_flags: <defaults>
</compile_context>

<pallas_src>
import jax
import jax.numpy as jnp
from jax.experimental import pallas as pl
from jax.experimental.pallas import tpu as pltpu

PAD = 128        # padded feature width (sublane axis inside the kernel)
TM_MAX = 4096    # max batch tile on the lane axis
BIAS_COL = 127   # lane where layer-2 / layer-3 biases are stashed


def _round_up(n, m):
    return ((n + m - 1) // m) * m


def _choose_tile(n):
    """Pick (tile, padded_batch).  Even tile count for v7x 2-TC balance."""
    n128 = _round_up(max(n, 1), 128)
    if n128 <= 256:                      # tiny batch: one tile, one step
        return n128, n128
    num = -(-n128 // TM_MAX)             # ceil-div
    if num % 2:                          # even #tiles -> both v7x TCs busy
        num += 1
    tm = _round_up(-(-n128 // num), 128)
    return tm, tm * num


def _mlp_kernel(x_ref, w_ref, o_ref):
    x = x_ref[...]                                   # (2, TM), batch on lanes

    # ---- Layer 1 (2 -> 3), VPU.  Computed over all 128 sublanes; padded
    # weight rows / bias entries are exact zeros, so rows >= 3 of h1 are 0.
    w1 = w_ref[0]                                    # (128, 128)
    z1 = (w1[:, 0:1] * x[0:1, :]
          + w1[:, 1:2] * x[1:2, :]
          + w1[:, 2:3])                              # bias lives in column 2
    h1 = jnp.tanh(z1)                                # (128, TM), rows>=3 == 0

    # ---- Layer 2 (3 -> 100), MXU.  Bias rides in column BIAS_COL of w2;
    # it contributes b2 * h1[127] == 0 inside the matmul, then is added once.
    w2 = w_ref[1]                                    # (128, 128)
    z2 = (jnp.dot(w2, h1, preferred_element_type=jnp.float32)
          + w2[:, BIAS_COL:BIAS_COL + 1])
    h2 = jnp.tanh(z2)                                # (128, TM), rows>=100 == 0

    # ---- Layer 3 (100 -> 3), MXU with output rows sliced to 8 sublanes
    # (8-aligned slice from row 0: free; 16x fewer result rows popped).
    w3 = w_ref[2][:8]                                # (8, 128)
    z3 = (jnp.dot(w3, h2, preferred_element_type=jnp.float32)
          + w3[:, BIAS_COL:BIAS_COL + 1])
    h3 = jnp.tanh(z3)                                # (8, TM)

    # ---- Layer 4 (3 -> 1) + sigmoid on the VPU (3 MACs/sample); no MXU pop,
    # no 128-row re-padding.  Lane-dense (1, TM) store.
    w4 = w_ref[3]                                    # (128, 128)
    z4 = (w4[0:1, 0:1] * h3[0:1, :]
          + w4[0:1, 1:2] * h3[1:2, :]
          + w4[0:1, 2:3] * h3[2:3, :]
          + w4[0:1, 3:4])                            # bias lives in column 3
    o_ref[...] = jax.nn.sigmoid(z4)


def pack_params(params):
    """Pack torch-layout (out,in) weights + biases into one (4,128,128) block.

    Call once per parameter update; keep the result and pass it to
    nnet_forward (keeps the ~10 scatter ops out of the per-call path).
    """
    (w1, b1), (w2, b2), (w3, b3), (w4, b4) = params
    wc = jnp.zeros((4, PAD, PAD), jnp.float32)
    wc = wc.at[0, :3, :2].set(w1.astype(jnp.float32))
    wc = wc.at[0, :3, 2].set(b1.astype(jnp.float32))          # L1 bias -> col 2
    wc = wc.at[1, :100, :3].set(w2.astype(jnp.float32))
    wc = wc.at[1, :100, BIAS_COL].set(b2.astype(jnp.float32))  # L2 bias
    wc = wc.at[2, :3, :100].set(w3.astype(jnp.float32))
    wc = wc.at[2, :3, BIAS_COL].set(b3.astype(jnp.float32))    # L3 bias
    wc = wc.at[3, :1, :3].set(w4.astype(jnp.float32))
    wc = wc.at[3, 0, 3].set(b4.astype(jnp.float32)[0])         # L4 bias -> col 3
    return wc


@jax.jit
def nnet_forward(x, wc):
    """x: (N, 2) -> (N, 1) float32, matching NNet.forward (x.float())."""
    x = x.astype(jnp.float32)
    n = x.shape[0]
    tm, n_pad = _choose_tile(n)

    # Batch on the lane axis; only the 2 real feature rows touch HBM.
    # TODO(synk): if the caller can supply x already as (2, N) contiguous,
    # this transpose+pad round-trip disappears from the per-call path.
    x_t = jnp.zeros((2, n_pad), jnp.float32).at[:, :n].set(x.T)

    out = pl.pallas_call(
        _mlp_kernel,
        out_shape=jax.ShapeDtypeStruct((1, n_pad), jnp.float32),
        grid_spec=pltpu.PrefetchScalarGridSpec(
            num_scalar_prefetch=0,
            grid=(n_pad // tm,),
            in_specs=[
                pl.BlockSpec((2, tm), lambda i: (0, i)),            # x tile
                pl.BlockSpec((4, PAD, PAD), lambda i: (0, 0, 0)),   # weights
            ],
            out_specs=pl.BlockSpec((1, tm), lambda i: (0, i)),
        ),
        compiler_params=pltpu.CompilerParams(
            dimension_semantics=("parallel",),
            # ~4 live (128, TM) f32 slabs at TM=4096 is ~8 MiB + 0.8 MiB of
            # pipeline buffers: 32 MiB covers all of v5e/v6e/v7x (<= physical
            # everywhere; raises v5e's 16 MiB default scoped limit).
            vmem_limit_bytes=32 * 1024 * 1024),
    )(x_t, wc)

    return out[0, :n].reshape(n, 1)


def init_params(key):
    """PyTorch-Linear-style uniform(+-1/sqrt(fan_in)); torch (out,in) layout."""
    dims = [(2, 3), (3, 100), (100, 3), (3, 1)]
    params = []
    for fan_in, fan_out in dims:
        key, kw, kb = jax.random.split(key, 3)
        bound = float(1.0 / (fan_in ** 0.5))
        w = jax.random.uniform(kw, (fan_out, fan_in), jnp.float32,
                               minval=-bound, maxval=bound)
        b = jax.random.uniform(kb, (fan_out,), jnp.float32,
                               minval=-bound, maxval=bound)
        params.append((w, b))
    return tuple(params)


def reference_forward(x, params):
    h = x.astype(jnp.float32)
    (w1, b1), (w2, b2), (w3, b3), (w4, b4) = params
    h = jnp.tanh(h @ w1.T + b1)
    h = jnp.tanh(h @ w2.T + b2)
    h = jnp.tanh(h @ w3.T + b3)
    return jax.nn.sigmoid(h @ w4.T + b4)


if __name__ == "__main__":
    key = jax.random.PRNGKey(0)
    key, kx, kx2 = jax.random.split(key, 3)
    params = init_params(key)
    wc = jax.block_until_ready(pack_params(params))   # hoisted out of fwd path

    # Small batch (single grid step), as the (2 -> ... -> 1) MLP implies.
    x = jax.random.normal(kx, (8, 2), jnp.float32)
    y = jax.block_until_ready(nnet_forward(x, wc))
    y_ref = reference_forward(x, params)
    assert y.shape == (8, 1)
    assert jnp.allclose(y, y_ref, atol=1e-4, rtol=1e-4)

    # Larger batch exercising the multi-tile (even-count) "parallel" grid.
    x2 = jax.random.normal(kx2, (2600, 2), jnp.float32)
    y2 = jax.block_until_ready(nnet_forward(x2, wc))
    y2_ref = reference_forward(x2, params)
    assert y2.shape == (2600, 1)
    assert jnp.allclose(y2, y2_ref, atol=1e-4, rtol=1e-4)

    print("KERNEL_OK")
</pallas_src>

<mosaic_0001>
module attributes {stable_mosaic.version = 11 : i64} {
  func.func @_mlp_kernel(%arg0: i32, %arg1: memref<2x128xf32, #tpu.memory_space<vmem>>, %arg2: memref<4x128x128xf32, #tpu.memory_space<vmem>>, %arg3: memref<1x128xf32, #tpu.memory_space<vmem>>) attributes {dimension_semantics = [#tpu.dimension_semantics<parallel>], iteration_bounds = array<i64: 1>, scalar_prefetch = 0 : i64, scratch_operands = 0 : i64, tpu.core_type = #tpu.core_type<tc>, window_params = [{transform_indices = @transform_0, window_bounds = array<i64: 2, 128>}, {pipeline_mode = #tpu.pipeline_mode<synchronous>, transform_indices = @transform_1, window_bounds = array<i64: 4, 128, 128>}, {transform_indices = @transform_2, window_bounds = array<i64: 1, 128>}]} {
    %c0 = arith.constant 0 : index
    %c0_0 = arith.constant 0 : index
    %0 = vector.load %arg1[%c0, %c0_0] : memref<2x128xf32, #tpu.memory_space<vmem>>, vector<2x128xf32>
    %c0_1 = arith.constant 0 : index
    %c0_2 = arith.constant 0 : index
    %c0_3 = arith.constant 0 : index
    %1 = vector.load %arg2[%c0_1, %c0_2, %c0_3] : memref<4x128x128xf32, #tpu.memory_space<vmem>>, vector<1x128x128xf32>
    %2 = vector.shape_cast %1 : vector<1x128x128xf32> to vector<128x128xf32>
    %3 = vector.extract_strided_slice %2 {offsets = [0, 0], sizes = [128, 1], strides = [1, 1]} : vector<128x128xf32> to vector<128x1xf32>
    %4 = vector.extract_strided_slice %0 {offsets = [0, 0], sizes = [1, 128], strides = [1, 1]} : vector<2x128xf32> to vector<1x128xf32>
    %5 = vector.broadcast %3 : vector<128x1xf32> to vector<128x128xf32>
    %6 = vector.broadcast %4 : vector<1x128xf32> to vector<128x128xf32>
    %7 = arith.mulf %5, %6 : vector<128x128xf32>
    %8 = vector.extract_strided_slice %2 {offsets = [0, 1], sizes = [128, 1], strides = [1, 1]} : vector<128x128xf32> to vector<128x1xf32>
    %9 = vector.extract_strided_slice %0 {offsets = [1, 0], sizes = [1, 128], strides = [1, 1]} : vector<2x128xf32> to vector<1x128xf32>
    %10 = vector.broadcast %8 : vector<128x1xf32> to vector<128x128xf32>
    %11 = vector.broadcast %9 : vector<1x128xf32> to vector<128x128xf32>
    %12 = arith.mulf %10, %11 : vector<128x128xf32>
    %13 = arith.addf %7, %12 : vector<128x128xf32>
    %14 = vector.extract_strided_slice %2 {offsets = [0, 2], sizes = [128, 1], strides = [1, 1]} : vector<128x128xf32> to vector<128x1xf32>
    %15 = vector.broadcast %14 : vector<128x1xf32> to vector<128x128xf32>
    %16 = arith.addf %13, %15 : vector<128x128xf32>
    %17 = math.tanh %16 : vector<128x128xf32>
    %c1 = arith.constant 1 : index
    %c0_4 = arith.constant 0 : index
    %c0_5 = arith.constant 0 : index
    %18 = vector.load %arg2[%c1, %c0_4, %c0_5] : memref<4x128x128xf32, #tpu.memory_space<vmem>>, vector<1x128x128xf32>
    %19 = vector.shape_cast %18 : vector<1x128x128xf32> to vector<128x128xf32>
    %cst = arith.constant dense<0.000000e+00> : vector<128x128xf32>
    %20 = tpu.matmul %19, %17, %cst {dimension_numbers = #tpu.dot_dimension_numbers<[1], [0], [0], [1], [0, 0, 1, 1], [], []>} : vector<128x128xf32>, vector<128x128xf32>, vector<128x128xf32> -> vector<128x128xf32>
    %21 = vector.extract_strided_slice %19 {offsets = [0, 127], sizes = [128, 1], strides = [1, 1]} : vector<128x128xf32> to vector<128x1xf32>
    %22 = vector.broadcast %21 : vector<128x1xf32> to vector<128x128xf32>
    %23 = arith.addf %20, %22 : vector<128x128xf32>
    %24 = math.tanh %23 : vector<128x128xf32>
    %c2 = arith.constant 2 : index
    %c0_6 = arith.constant 0 : index
    %c0_7 = arith.constant 0 : index
    %25 = vector.load %arg2[%c2, %c0_6, %c0_7] : memref<4x128x128xf32, #tpu.memory_space<vmem>>, vector<1x128x128xf32>
    %26 = vector.shape_cast %25 : vector<1x128x128xf32> to vector<128x128xf32>
    %27 = vector.extract_strided_slice %26 {offsets = [0, 0], sizes = [8, 128], strides = [1, 1]} : vector<128x128xf32> to vector<8x128xf32>
    %cst_8 = arith.constant dense<0.000000e+00> : vector<8x128xf32>
    %28 = tpu.matmul %27, %24, %cst_8 {dimension_numbers = #tpu.dot_dimension_numbers<[1], [0], [0], [1], [0, 0, 1, 1], [], []>} : vector<8x128xf32>, vector<128x128xf32>, vector<8x128xf32> -> vector<8x128xf32>
    %29 = vector.extract_strided_slice %27 {offsets = [0, 127], sizes = [8, 1], strides = [1, 1]} : vector<8x128xf32> to vector<8x1xf32>
    %30 = vector.broadcast %29 : vector<8x1xf32> to vector<8x128xf32>
    %31 = arith.addf %28, %30 : vector<8x128xf32>
    %32 = math.tanh %31 : vector<8x128xf32>
    %c3 = arith.constant 3 : index
    %c0_9 = arith.constant 0 : index
    %c0_10 = arith.constant 0 : index
    %33 = vector.load %arg2[%c3, %c0_9, %c0_10] : memref<4x128x128xf32, #tpu.memory_space<vmem>>, vector<1x128x128xf32>
    %34 = vector.shape_cast %33 : vector<1x128x128xf32> to vector<128x128xf32>
    %35 = vector.extract_strided_slice %34 {offsets = [0, 0], sizes = [1, 1], strides = [1, 1]} : vector<128x128xf32> to vector<1x1xf32>
    %36 = vector.extract_strided_slice %32 {offsets = [0, 0], sizes = [1, 128], strides = [1, 1]} : vector<8x128xf32> to vector<1x128xf32>
    %37 = vector.broadcast %35 : vector<1x1xf32> to vector<1x128xf32>
    %38 = arith.mulf %37, %36 : vector<1x128xf32>
    %39 = vector.extract_strided_slice %34 {offsets = [0, 1], sizes = [1, 1], strides = [1, 1]} : vector<128x128xf32> to vector<1x1xf32>
    %40 = vector.extract_strided_slice %32 {offsets = [1, 0], sizes = [1, 128], strides = [1, 1]} : vector<8x128xf32> to vector<1x128xf32>
    %41 = vector.broadcast %39 : vector<1x1xf32> to vector<1x128xf32>
    %42 = arith.mulf %41, %40 : vector<1x128xf32>
    %43 = arith.addf %38, %42 : vector<1x128xf32>
    %44 = vector.extract_strided_slice %34 {offsets = [0, 2], sizes = [1, 1], strides = [1, 1]} : vector<128x128xf32> to vector<1x1xf32>
    %45 = vector.extract_strided_slice %32 {offsets = [2, 0], sizes = [1, 128], strides = [1, 1]} : vector<8x128xf32> to vector<1x128xf32>
    %46 = vector.broadcast %44 : vector<1x1xf32> to vector<1x128xf32>
    %47 = arith.mulf %46, %45 : vector<1x128xf32>
    %48 = arith.addf %43, %47 : vector<1x128xf32>
    %49 = vector.extract_strided_slice %34 {offsets = [0, 3], sizes = [1, 1], strides = [1, 1]} : vector<128x128xf32> to vector<1x1xf32>
    %50 = vector.broadcast %49 : vector<1x1xf32> to vector<1x128xf32>
    %51 = arith.addf %48, %50 : vector<1x128xf32>
    %52 = arith.negf %51 : vector<1x128xf32>
    %53 = math.exp %52 : vector<1x128xf32>
    %cst_11 = arith.constant 1.000000e+00 : f32
    %54 = vector.broadcast %cst_11 : f32 to vector<1x128xf32>
    %55 = arith.addf %54, %53 : vector<1x128xf32>
    %56 = arith.divf %54, %55 : vector<1x128xf32>
    %c0_12 = arith.constant 0 : index
    %c0_13 = arith.constant 0 : index
    %57 = vector.load %arg3[%c0_12, %c0_13] : memref<1x128xf32, #tpu.memory_space<vmem>>, vector<1x128xf32>
    tpu.vector_store %arg3[%c0_12, %c0_13], %56 {strides = array<i32>} : memref<1x128xf32, #tpu.memory_space<vmem>>, vector<1x128xf32>,
    return
  }
  func.func @transform_0(%arg0: i32) -> (i32, i32) {
    %c0_i32 = arith.constant 0 : i32
    %c0_i32_0 = arith.constant 0 : i32
    return %c0_i32, %arg0 : i32, i32
  }
  func.func @transform_1(%arg0: i32) -> (i32, i32, i32) {
    %c0_i32 = arith.constant 0 : i32
    %c0_i32_0 = arith.constant 0 : i32
    %c0_i32_1 = arith.constant 0 : i32
    %c0_i32_2 = arith.constant 0 : i32
    return %c0_i32, %c0_i32_0, %c0_i32_1 : i32, i32, i32
  }
  func.func @transform_2(%arg0: i32) -> (i32, i32) {
    %c0_i32 = arith.constant 0 : i32
    %c0_i32_0 = arith.constant 0 : i32
    return %c0_i32, %arg0 : i32, i32
  }
}

</mosaic_0001>

<llo_original>
// kernel: nnet_forward.1
$region0: #{nnet_forward.1}
  #allocation0 [shape = 'u32[]', space=smem, size = 0x4, offset = 0x4, fixed_abs, tag = 'smem constant byte address 0x4 - core index']
  #allocation1 [shape = 'u32[144,128]{1,0:T(1,128)}', space=vmem, size = 0x12000, scoped, tag = 'internal scratch']
  %s0 = inlined_call_operand.vmem [shape: f32[2,128], index: 0, kind: input, shape index: {}]
  %s1 = inlined_call_operand.hbm [shape: f32[4,128,128], index: 1, kind: input, shape index: {}]
  %s2 = inlined_call_operand.vmem [shape: f32[1,128], index: 2, kind: output, shape index: {}]
  %s3 = sld [smem:[#allocation0]]
  $region22: #{nnet_forward.1} parent=0
    _
  %s5 = ssub.s32 1, %s3
  %s6 = scalar_select 0, %s5, %s3
  $region1: #{nnet_forward.1} parent=0
    #allocation2 [shape = 'u8[262144]{0}', space=vmem, size = 0x40000, scoped, tag = 'input window, operand 1, single buffered']
    #allocation3 [shape = 's32[1]{0}', space=sflag, size = 0x4, scoped, tag = 'scoped memory for nnet_forward.1']
    %7 = vsyncpa [#allocation3], 0
    // Predicated region
    $region2: #{nnet_forward.1} parent=1 // pred_check
      _
    $region3: #{nnet_forward.1} parent=1 // pred_check_branch
      %9 = sbr.rel (0) target = $region5
    $region4: #{nnet_forward.1} parent=1 // pred_region
      _
    $region5: #{nnet_forward.1} parent=1 // pred_fallthru
      _
    // Predicated region
    $region6: #{nnet_forward.1} parent=1 // pred_check
      _
    $region7: #{nnet_forward.1} parent=1 // pred_check_branch
      %11 = sbr.rel (0) target = $region9
    $region8: #{nnet_forward.1} parent=1 // pred_region
      %s13 = ssub.s32 8192, 8192
      %14 = vsyncadd [#allocation3], %s13
      %s15 = sshll.u32 [#allocation2], 4
      %s16 = int_to_ptr.vmem [resolvable:$true] %s15
      %21 = dma.hbm_to_vmem [thread:$0]  %s1, 8192, %s16, [#allocation3], 128, 128, 8
    $region9: #{nnet_forward.1} parent=1 // pred_fallthru
      _
    // Predicated region
    $region10: #{nnet_forward.1} parent=1 // pred_check
      _
    $region11: #{nnet_forward.1} parent=1 // pred_check_branch
      %23 = sbr.rel (0) target = $region13
    $region12: #{nnet_forward.1} parent=1 // pred_region
      %24 = dma.done [#allocation3], 8192
    $region13: #{nnet_forward.1} parent=1 // pred_fallthru
      _
    %v25 = vld [vmem:[%s0] sm:$0x3]
    %v26 = vld [vmem:[#allocation2] sm:$0xff]
    %v27 = vld [vmem:[#allocation2 + $0x8] sm:$0xff]
    %v28 = vld [vmem:[#allocation2 + $0x10] sm:$0xff]
    %v29 = vld [vmem:[#allocation2 + $0x18] sm:$0xff]
    %v30 = vld [vmem:[#allocation2 + $0x20] sm:$0xff]
    %v31 = vld [vmem:[#allocation2 + $0x28] sm:$0xff]
    %v32 = vld [vmem:[#allocation2 + $0x30] sm:$0xff]
    %v33 = vld [vmem:[#allocation2 + $0x38] sm:$0xff]
    %v34 = vld [vmem:[#allocation2 + $0x40] sm:$0xff]
    %v35 = vld [vmem:[#allocation2 + $0x48] sm:$0xff]
    %v36 = vld [vmem:[#allocation2 + $0x50] sm:$0xff]
    %v37 = vld [vmem:[#allocation2 + $0x58] sm:$0xff]
    %v38 = vld [vmem:[#allocation2 + $0x60] sm:$0xff]
    %v39 = vld [vmem:[#allocation2 + $0x68] sm:$0xff]
    %v40 = vld [vmem:[#allocation2 + $0x70] sm:$0xff]
    %v41 = vld [vmem:[#allocation2 + $0x78] sm:$0xff]
    %43 = vset.pattern.permute.xlu0 0
    %44 = vperm.xlu0 %43, %v26
    %v45 = vpop.permute.xlu0 %44
    %48 = vset.pattern.permute.xlu0 0
    %49 = vperm.xlu0 %48, %v27
    %v50 = vpop.permute.xlu0 %49
    %53 = vset.pattern.permute.xlu0 0
    %54 = vperm.xlu0 %53, %v28
    %v55 = vpop.permute.xlu0 %54
    %58 = vset.pattern.permute.xlu0 0
    %59 = vperm.xlu0 %58, %v29
    %v60 = vpop.permute.xlu0 %59
    %63 = vset.pattern.permute.xlu0 0
    %64 = vperm.xlu0 %63, %v30
    %v65 = vpop.permute.xlu0 %64
    %68 = vset.pattern.permute.xlu0 0
    %69 = vperm.xlu0 %68, %v31
    %v70 = vpop.permute.xlu0 %69
    %73 = vset.pattern.permute.xlu0 0
    %74 = vperm.xlu0 %73, %v32
    %v75 = vpop.permute.xlu0 %74
    %78 = vset.pattern.permute.xlu0 0
    %79 = vperm.xlu0 %78, %v33
    %v80 = vpop.permute.xlu0 %79
    %83 = vset.pattern.permute.xlu0 0
    %84 = vperm.xlu0 %83, %v34
    %v85 = vpop.permute.xlu0 %84
    %88 = vset.pattern.permute.xlu0 0
    %89 = vperm.xlu0 %88, %v35
    %v90 = vpop.permute.xlu0 %89
    %93 = vset.pattern.permute.xlu0 0
    %94 = vperm.xlu0 %93, %v36
    %v95 = vpop.permute.xlu0 %94
    %98 = vset.pattern.permute.xlu0 0
    %99 = vperm.xlu0 %98, %v37
    %v100 = vpop.permute.xlu0 %99
    %103 = vset.pattern.permute.xlu0 0
    %104 = vperm.xlu0 %103, %v38
    %v105 = vpop.permute.xlu0 %104
    %108 = vset.pattern.permute.xlu0 0
    %109 = vperm.xlu0 %108, %v39
    %v110 = vpop.permute.xlu0 %109
    %113 = vset.pattern.permute.xlu0 0
    %114 = vperm.xlu0 %113, %v40
    %v115 = vpop.permute.xlu0 %114
    %118 = vset.pattern.permute.xlu0 0
    %119 = vperm.xlu0 %118, %v41
    %v120 = vpop.permute.xlu0 %119
    %v122 = vlaneseq
    %v123 = vshrl.u32 %v122, 7
    %v124 = vsub.s32 0, %v123
    %v125 = vrot.slane %v25, %v124
    %v126 = vmul.f32 %v45, %v125
    %v127 = vmul.f32 %v50, %v125
    %v128 = vmul.f32 %v55, %v125
    %v129 = vmul.f32 %v60, %v125
    %v130 = vmul.f32 %v65, %v125
    %v131 = vmul.f32 %v70, %v125
    %v132 = vmul.f32 %v75, %v125
    %v133 = vmul.f32 %v80, %v125
    %v134 = vmul.f32 %v85, %v125
    %v135 = vmul.f32 %v90, %v125
    %v136 = vmul.f32 %v95, %v125
    %v137 = vmul.f32 %v100, %v125
    %v138 = vmul.f32 %v105, %v125
    %v139 = vmul.f32 %v110, %v125
    %v140 = vmul.f32 %v115, %v125
    %v141 = vmul.f32 %v120, %v125
    %142 = vset.pattern.permute.xlu0 1
    %143 = vperm.xlu0 %142, %v26
    %v144 = vpop.permute.xlu0 %143
    %146 = vset.pattern.permute.xlu0 1
    %147 = vperm.xlu0 %146, %v27
    %v148 = vpop.permute.xlu0 %147
    %150 = vset.pattern.permute.xlu0 1
    %151 = vperm.xlu0 %150, %v28
    %v152 = vpop.permute.xlu0 %151
    %154 = vset.pattern.permute.xlu0 1
    %155 = vperm.xlu0 %154, %v29
    %v156 = vpop.permute.xlu0 %155
    %158 = vset.pattern.permute.xlu0 1
    %159 = vperm.xlu0 %158, %v30
    %v160 = vpop.permute.xlu0 %159
    %162 = vset.pattern.permute.xlu0 1
    %163 = vperm.xlu0 %162, %v31
    %v164 = vpop.permute.xlu0 %163
    %166 = vset.pattern.permute.xlu0 1
    %167 = vperm.xlu0 %166, %v32
    %v168 = vpop.permute.xlu0 %167
    %170 = vset.pattern.permute.xlu0 1
    %171 = vperm.xlu0 %170, %v33
    %v172 = vpop.permute.xlu0 %171
    %174 = vset.pattern.permute.xlu0 1
    %175 = vperm.xlu0 %174, %v34
    %v176 = vpop.permute.xlu0 %175
    %178 = vset.pattern.permute.xlu0 1
    %179 = vperm.xlu0 %178, %v35
    %v180 = vpop.permute.xlu0 %179
    %182 = vset.pattern.permute.xlu0 1
    %183 = vperm.xlu0 %182, %v36
    %v184 = vpop.permute.xlu0 %183
    %186 = vset.pattern.permute.xlu0 1
    %187 = vperm.xlu0 %186, %v37
    %v188 = vpop.permute.xlu0 %187
    %190 = vset.pattern.permute.xlu0 1
    %191 = vperm.xlu0 %190, %v38
    %v192 = vpop.permute.xlu0 %191
    %194 = vset.pattern.permute.xlu0 1
    %195 = vperm.xlu0 %194, %v39
    %v196 = vpop.permute.xlu0 %195
    %198 = vset.pattern.permute.xlu0 1
    %199 = vperm.xlu0 %198, %v40
    %v200 = vpop.permute.xlu0 %199
    %202 = vset.pattern.permute.xlu0 1
    %203 = vperm.xlu0 %202, %v41
    %v204 = vpop.permute.xlu0 %203
    %v206 = vlaneseq
    %v207 = vshrl.u32 %v206, 7
    %v208 = vsub.s32 1, %v207
    %v209 = vrot.slane %v25, %v208
    %v210 = vmul.f32 %v144, %v209
    %v211 = vmul.f32 %v148, %v209
    %v212 = vmul.f32 %v152, %v209
    %v213 = vmul.f32 %v156, %v209
    %v214 = vmul.f32 %v160, %v209
    %v215 = vmul.f32 %v164, %v209
    %v216 = vmul.f32 %v168, %v209
    %v217 = vmul.f32 %v172, %v209
    %v218 = vmul.f32 %v176, %v209
    %v219 = vmul.f32 %v180, %v209
    %v220 = vmul.f32 %v184, %v209
    %v221 = vmul.f32 %v188, %v209
    %v222 = vmul.f32 %v192, %v209
    %v223 = vmul.f32 %v196, %v209
    %v224 = vmul.f32 %v200, %v209
    %v225 = vmul.f32 %v204, %v209
    %v226 = vadd.f32 %v126, %v210
    %v227 = vadd.f32 %v127, %v211
    %v228 = vadd.f32 %v128, %v212
    %v229 = vadd.f32 %v129, %v213
    %v230 = vadd.f32 %v130, %v214
    %v231 = vadd.f32 %v131, %v215
    %v232 = vadd.f32 %v132, %v216
    %v233 = vadd.f32 %v133, %v217
    %v234 = vadd.f32 %v134, %v218
    %v235 = vadd.f32 %v135, %v219
    %v236 = vadd.f32 %v136, %v220
    %v237 = vadd.f32 %v137, %v221
    %v238 = vadd.f32 %v138, %v222
    %v239 = vadd.f32 %v139, %v223
    %v240 = vadd.f32 %v140, %v224
    %v241 = vadd.f32 %v141, %v225
    %242 = vset.pattern.permute.xlu0 2
    %243 = vperm.xlu0 %242, %v26
    %v244 = vpop.permute.xlu0 %243
    %246 = vset.pattern.permute.xlu0 2
    %247 = vperm.xlu0 %246, %v27
    %v248 = vpop.permute.xlu0 %247
    %250 = vset.pattern.permute.xlu0 2
    %251 = vperm.xlu0 %250, %v28
    %v252 = vpop.permute.xlu0 %251
    %254 = vset.pattern.permute.xlu0 2
    %255 = vperm.xlu0 %254, %v29
    %v256 = vpop.permute.xlu0 %255
    %258 = vset.pattern.permute.xlu0 2
    %259 = vperm.xlu0 %258, %v30
    %v260 = vpop.permute.xlu0 %259
    %262 = vset.pattern.permute.xlu0 2
    %263 = vperm.xlu0 %262, %v31
    %v264 = vpop.permute.xlu0 %263
    %266 = vset.pattern.permute.xlu0 2
    %267 = vperm.xlu0 %266, %v32
    %v268 = vpop.permute.xlu0 %267
    %270 = vset.pattern.permute.xlu0 2
    %271 = vperm.xlu0 %270, %v33
    %v272 = vpop.permute.xlu0 %271
    %274 = vset.pattern.permute.xlu0 2
    %275 = vperm.xlu0 %274, %v34
    %v276 = vpop.permute.xlu0 %275
    %278 = vset.pattern.permute.xlu0 2
    %279 = vperm.xlu0 %278, %v35
    %v280 = vpop.permute.xlu0 %279
    %282 = vset.pattern.permute.xlu0 2
    %283 = vperm.xlu0 %282, %v36
    %v284 = vpop.permute.xlu0 %283
    %286 = vset.pattern.permute.xlu0 2
    %287 = vperm.xlu0 %286, %v37
    %v288 = vpop.permute.xlu0 %287
    %290 = vset.pattern.permute.xlu0 2
    %291 = vperm.xlu0 %290, %v38
    %v292 = vpop.permute.xlu0 %291
    %294 = vset.pattern.permute.xlu0 2
    %295 = vperm.xlu0 %294, %v39
    %v296 = vpop.permute.xlu0 %295
    %298 = vset.pattern.permute.xlu0 2
    %299 = vperm.xlu0 %298, %v40
    %v300 = vpop.permute.xlu0 %299
    %302 = vset.pattern.permute.xlu0 2
    %303 = vperm.xlu0 %302, %v41
    %v304 = vpop.permute.xlu0 %303
    %v306 = vadd.f32 %v226, %v244
    %v307 = vadd.f32 %v227, %v248
    %v308 = vadd.f32 %v228, %v252
    %v309 = vadd.f32 %v229, %v256
    %v310 = vadd.f32 %v230, %v260
    %v311 = vadd.f32 %v231, %v264
    %v312 = vadd.f32 %v232, %v268
    %v313 = vadd.f32 %v233, %v272
    %v314 = vadd.f32 %v234, %v276
    %v315 = vadd.f32 %v235, %v280
    %v316 = vadd.f32 %v236, %v284
    %v317 = vadd.f32 %v237, %v288
    %v318 = vadd.f32 %v238, %v292
    %v319 = vadd.f32 %v239, %v296
    %v320 = vadd.f32 %v240, %v300
    %v321 = vadd.f32 %v241, %v304
    %v322 = vtanh.pop %v306
    %v323 = vtanh.pop %v307
    %v324 = vtanh.pop %v308
    %v325 = vtanh.pop %v309
    %v326 = vtanh.pop %v310
    %v327 = vtanh.pop %v311
    %v328 = vtanh.pop %v312
    %v329 = vtanh.pop %v313
    %v330 = vtanh.pop %v314
    %v331 = vtanh.pop %v315
    %v332 = vtanh.pop %v316
    %v333 = vtanh.pop %v317
    %v334 = vtanh.pop %v318
    %v335 = vtanh.pop %v319
    %v336 = vtanh.pop %v320
    %v337 = vtanh.pop %v321
    %s338 = scalar_lea.vmem [#allocation2], 128
    %v339 = vld [vmem:[%s338] sm:$0xff]
    %v340 = vld [vmem:[%s338 + $0x8] sm:$0xff]
    %v341 = vld [vmem:[%s338 + $0x10] sm:$0xff]
    %v342 = vld [vmem:[%s338 + $0x18] sm:$0xff]
    %v343 = vld [vmem:[%s338 + $0x20] sm:$0xff]
    %v344 = vld [vmem:[%s338 + $0x28] sm:$0xff]
    %v345 = vld [vmem:[%s338 + $0x30] sm:$0xff]
    %v346 = vld [vmem:[%s338 + $0x38] sm:$0xff]
    %v347 = vld [vmem:[%s338 + $0x40] sm:$0xff]
    %v348 = vld [vmem:[%s338 + $0x48] sm:$0xff]
    %v349 = vld [vmem:[%s338 + $0x50] sm:$0xff]
    %v350 = vld [vmem:[%s338 + $0x58] sm:$0xff]
    %v351 = vld [vmem:[%s338 + $0x60] sm:$0xff]
    %v352 = vld [vmem:[%s338 + $0x68] sm:$0xff]
    %v353 = vld [vmem:[%s338 + $0x70] sm:$0xff]
    %v354 = vld [vmem:[%s338 + $0x78] sm:$0xff]
    %356 = vset.pattern.permute.xlu0 127
    %357 = vperm.xlu0 %356, %v339
    %v358 = vpop.permute.xlu0 %357
    %361 = vset.pattern.permute.xlu0 127
    %362 = vperm.xlu0 %361, %v340
    %v363 = vpop.permute.xlu0 %362
    %366 = vset.pattern.permute.xlu0 127
    %367 = vperm.xlu0 %366, %v341
    %v368 = vpop.permute.xlu0 %367
    %371 = vset.pattern.permute.xlu0 127
    %372 = vperm.xlu0 %371, %v342
    %v373 = vpop.permute.xlu0 %372
    %376 = vset.pattern.permute.xlu0 127
    %377 = vperm.xlu0 %376, %v343
    %v378 = vpop.permute.xlu0 %377
    %381 = vset.pattern.permute.xlu0 127
    %382 = vperm.xlu0 %381, %v344
    %v383 = vpop.permute.xlu0 %382
    %386 = vset.pattern.permute.xlu0 127
    %387 = vperm.xlu0 %386, %v345
    %v388 = vpop.permute.xlu0 %387
    %391 = vset.pattern.permute.xlu0 127
    %392 = vperm.xlu0 %391, %v346
    %v393 = vpop.permute.xlu0 %392
    %396 = vset.pattern.permute.xlu0 127
    %397 = vperm.xlu0 %396, %v347
    %v398 = vpop.permute.xlu0 %397
    %401 = vset.pattern.permute.xlu0 127
    %402 = vperm.xlu0 %401, %v348
    %v403 = vpop.permute.xlu0 %402
    %406 = vset.pattern.permute.xlu0 127
    %407 = vperm.xlu0 %406, %v349
    %v408 = vpop.permute.xlu0 %407
    %411 = vset.pattern.permute.xlu0 127
    %412 = vperm.xlu0 %411, %v350
    %v413 = vpop.permute.xlu0 %412
    %416 = vset.pattern.permute.xlu0 127
    %417 = vperm.xlu0 %416, %v351
    %v418 = vpop.permute.xlu0 %417
    %421 = vset.pattern.permute.xlu0 127
    %422 = vperm.xlu0 %421, %v352
    %v423 = vpop.permute.xlu0 %422
    %426 = vset.pattern.permute.xlu0 127
    %427 = vperm.xlu0 %426, %v353
    %v428 = vpop.permute.xlu0 %427
    %431 = vset.pattern.permute.xlu0 127
    %432 = vperm.xlu0 %431, %v354
    %v433 = vpop.permute.xlu0 %432
    %435 = vmatprep.subr.mxu0 0.0
    %436 = vmatpush1.msra.mxu0 %v322
    %437 = vmatprep.subr.mxu0 0.0
    %438 = vmatpush1.msra.mxu0 %v323
    %439 = vmatprep.subr.mxu0 0.0
    %440 = vmatpush1.msra.mxu0 %v324
    %441 = vmatprep.subr.mxu0 0.0
    %442 = vmatpush1.msra.mxu0 %v325
    %443 = vmatprep.subr.mxu0 0.0
    %444 = vmatpush1.msra.mxu0 %v326
    %445 = vmatprep.subr.mxu0 0.0
    %446 = vmatpush1.msra.mxu0 %v327
    %447 = vmatprep.subr.mxu0 0.0
    %448 = vmatpush1.msra.mxu0 %v328
    %449 = vmatprep.subr.mxu0 0.0
    %450 = vmatpush1.msra.mxu0 %v329
    %451 = vmatprep.subr.mxu0 0.0
    %452 = vmatpush1.msra.mxu0 %v330
    %453 = vmatprep.subr.mxu0 0.0
    %454 = vmatpush1.msra.mxu0 %v331
    %455 = vmatprep.subr.mxu0 0.0
    %456 = vmatpush1.msra.mxu0 %v332
    %457 = vmatprep.subr.mxu0 0.0
    %458 = vmatpush1.msra.mxu0 %v333
    %459 = vmatprep.subr.mxu0 0.0
    %460 = vmatpush1.msra.mxu0 %v334
    %461 = vmatprep.subr.mxu0 0.0
    %462 = vmatpush1.msra.mxu0 %v335
    %463 = vmatprep.subr.mxu0 0.0
    %464 = vmatpush1.msra.mxu0 %v336
    %465 = vmatprep.subr.mxu0 0.0
    %466 = vmatpush1.msra.mxu0 %v337
    %467 = vmatprep.subr.mxu0 0.0
    %468 = vmatpush1.msra.mxu0 0.0
    %469 = vmatprep.subr.mxu0 0.0
    %470 = vmatpush1.msra.mxu0 0.0
    %471 = vmatprep.subr.mxu0 0.0
    %472 = vmatpush1.msra.mxu0 0.0
    %473 = vmatprep.subr.mxu0 0.0
    %474 = vmatpush1.msra.mxu0 0.0
    %475 = vmatprep.subr.mxu0 0.0
    %476 = vmatpush1.msra.mxu0 0.0
    %477 = vmatprep.subr.mxu0 0.0
    %478 = vmatpush1.msra.mxu0 0.0
    %479 = vmatprep.subr.mxu0 0.0
    %480 = vmatpush1.msra.mxu0 0.0
    %481 = vmatprep.subr.mxu0 0.0
    %482 = vmatpush1.msra.mxu0 0.0
    %483 = vmatprep.subr.mxu0 0.0
    %484 = vmatpush1.msra.mxu0 0.0
    %485 = vmatprep.subr.mxu0 0.0
    %486 = vmatpush1.msra.mxu0 0.0
    %487 = vmatprep.subr.mxu0 0.0
    %488 = vmatpush1.msra.mxu0 0.0
    %489 = vmatprep.subr.mxu0 0.0
    %490 = vmatpush1.msra.mxu0 0.0
    %491 = vmatprep.subr.mxu0 0.0
    %492 = vmatpush1.msra.mxu0 0.0
    %493 = vmatprep.subr.mxu0 0.0
    %494 = vmatpush1.msra.mxu0 0.0
    %495 = vmatprep.subr.mxu0 0.0
    %496 = vmatpush1.msra.mxu0 0.0
    %497 = vmatprep.subr.mxu0 0.0
    %498 = vmatpush1.msra.mxu0 0.0
    %499 = vmatprep.mubr.f32.mxu0 0.0
    %500 = vmatmul.mubr.f32.gmra.mrb[0].mxu0 %v339
    %v501 = vpop.f32.mrb[0].mxu0
    %v502 = vadd.f32 %v358, %v501
    %v503 = vpop.f32.mrb[0].mxu0
    %504 = vmatprep.mubr.f32.mxu0 0.0
    %505 = vmatmul.mubr.f32.gmra.mrb[0].mxu0 %v340
    %v506 = vpop.f32.mrb[0].mxu0
    %v507 = vadd.f32 %v363, %v506
    %v508 = vpop.f32.mrb[0].mxu0
    %509 = vmatprep.mubr.f32.mxu0 0.0
    %510 = vmatmul.mubr.f32.gmra.mrb[0].mxu0 %v341
    %v511 = vpop.f32.mrb[0].mxu0
    %v512 = vadd.f32 %v368, %v511
    %v513 = vpop.f32.mrb[0].mxu0
    %514 = vmatprep.mubr.f32.mxu0 0.0
    %515 = vmatmul.mubr.f32.gmra.mrb[0].mxu0 %v342
    %v516 = vpop.f32.mrb[0].mxu0
    %v517 = vadd.f32 %v373, %v516
    %v518 = vpop.f32.mrb[0].mxu0
    %519 = vmatprep.mubr.f32.mxu0 0.0
    %520 = vmatmul.mubr.f32.gmra.mrb[0].mxu0 %v343
    %v521 = vpop.f32.mrb[0].mxu0
    %v522 = vadd.f32 %v378, %v521
    %v523 = vpop.f32.mrb[0].mxu0
    %524 = vmatprep.mubr.f32.mxu0 0.0
    %525 = vmatmul.mubr.f32.gmra.mrb[0].mxu0 %v344
    %v526 = vpop.f32.mrb[0].mxu0
    %v527 = vadd.f32 %v383, %v526
    %v528 = vpop.f32.mrb[0].mxu0
    %529 = vmatprep.mubr.f32.mxu0 0.0
    %530 = vmatmul.mubr.f32.gmra.mrb[0].mxu0 %v345
    %v531 = vpop.f32.mrb[0].mxu0
    %v532 = vadd.f32 %v388, %v531
    %v533 = vpop.f32.mrb[0].mxu0
    %534 = vmatprep.mubr.f32.mxu0 0.0
    %535 = vmatmul.mubr.f32.gmra.mrb[0].mxu0 %v346
    %v536 = vpop.f32.mrb[0].mxu0
    %v537 = vadd.f32 %v393, %v536
    %v538 = vpop.f32.mrb[0].mxu0
    %539 = vmatprep.mubr.f32.mxu0 0.0
    %540 = vmatmul.mubr.f32.gmra.mrb[0].mxu0 %v347
    %v541 = vpop.f32.mrb[0].mxu0
    %v542 = vadd.f32 %v398, %v541
    %v543 = vpop.f32.mrb[0].mxu0
    %544 = vmatprep.mubr.f32.mxu0 0.0
    %545 = vmatmul.mubr.f32.gmra.mrb[0].mxu0 %v348
    %v546 = vpop.f32.mrb[0].mxu0
    %v547 = vadd.f32 %v403, %v546
    %v548 = vpop.f32.mrb[0].mxu0
    %549 = vmatprep.mubr.f32.mxu0 0.0
    %550 = vmatmul.mubr.f32.gmra.mrb[0].mxu0 %v349
    %v551 = vpop.f32.mrb[0].mxu0
    %v552 = vadd.f32 %v408, %v551
    %v553 = vpop.f32.mrb[0].mxu0
    %554 = vmatprep.mubr.f32.mxu0 0.0
    %555 = vmatmul.mubr.f32.gmra.mrb[0].mxu0 %v350
    %v556 = vpop.f32.mrb[0].mxu0
    %v557 = vadd.f32 %v413, %v556
    %v558 = vpop.f32.mrb[0].mxu0
    %559 = vmatprep.mubr.f32.mxu0 0.0
    %560 = vmatmul.mubr.f32.gmra.mrb[0].mxu0 %v351
    %v561 = vpop.f32.mrb[0].mxu0
    %v562 = vadd.f32 %v418, %v561
    %v563 = vpop.f32.mrb[0].mxu0
    %564 = vmatprep.mubr.f32.mxu0 0.0
    %565 = vmatmul.mubr.f32.gmra.mrb[0].mxu0 %v352
    %v566 = vpop.f32.mrb[0].mxu0
    %v567 = vadd.f32 %v423, %v566
    %v568 = vpop.f32.mrb[0].mxu0
    %569 = vmatprep.mubr.f32.mxu0 0.0
    %570 = vmatmul.mubr.f32.gmra.mrb[0].mxu0 %v353
    %v571 = vpop.f32.mrb[0].mxu0
    %v572 = vadd.f32 %v428, %v571
    %v573 = vpop.f32.mrb[0].mxu0
    %574 = vmatprep.mubr.f32.mxu0 0.0
    %575 = vmatmul.mubr.f32.gmra.mrb[0].mxu0 %v354
    %v576 = vpop.f32.mrb[0].mxu0
    %v577 = vadd.f32 %v433, %v576
    %v578 = vpop.f32.mrb[0].mxu0
    %579 = vdwg.mxu0
    %v580 = vtanh.pop %v502
    %v581 = vtanh.pop %v507
    %v582 = vtanh.pop %v512
    %v583 = vtanh.pop %v517
    %v584 = vtanh.pop %v522
    %v585 = vtanh.pop %v527
    %v586 = vtanh.pop %v532
    %v587 = vtanh.pop %v537
    %v588 = vtanh.pop %v542
    %v589 = vtanh.pop %v547
    %v590 = vtanh.pop %v552
    %v591 = vtanh.pop %v557
    %v592 = vtanh.pop %v562
    %v593 = vtanh.pop %v567
    %v594 = vtanh.pop %v572
    %v595 = vtanh.pop %v577
    %s596 = scalar_lea.vmem [#allocation2], 256
    %v597 = vld [vmem:[%s596] sm:$0xff]
    %599 = vset.pattern.permute.xlu0 127
    %600 = vperm.xlu0 %599, %v597
    %v601 = vpop.permute.xlu0 %600
    %603 = vmatprep.subr.mxu0 0.0
    %604 = vmatpush1.msra.mxu0 %v580
    %605 = vmatprep.subr.mxu0 0.0
    %606 = vmatpush1.msra.mxu0 %v581
    %607 = vmatprep.subr.mxu0 0.0
    %608 = vmatpush1.msra.mxu0 %v582
    %609 = vmatprep.subr.mxu0 0.0
    %610 = vmatpush1.msra.mxu0 %v583
    %611 = vmatprep.subr.mxu0 0.0
    %612 = vmatpush1.msra.mxu0 %v584
    %613 = vmatprep.subr.mxu0 0.0
    %614 = vmatpush1.msra.mxu0 %v585
    %615 = vmatprep.subr.mxu0 0.0
    %616 = vmatpush1.msra.mxu0 %v586
    %617 = vmatprep.subr.mxu0 0.0
    %618 = vmatpush1.msra.mxu0 %v587
    %619 = vmatprep.subr.mxu0 0.0
    %620 = vmatpush1.msra.mxu0 %v588
    %621 = vmatprep.subr.mxu0 0.0
    %622 = vmatpush1.msra.mxu0 %v589
    %623 = vmatprep.subr.mxu0 0.0
    %624 = vmatpush1.msra.mxu0 %v590
    %625 = vmatprep.subr.mxu0 0.0
    %626 = vmatpush1.msra.mxu0 %v591
    %627 = vmatprep.subr.mxu0 0.0
    %628 = vmatpush1.msra.mxu0 %v592
    %629 = vmatprep.subr.mxu0 0.0
    %630 = vmatpush1.msra.mxu0 %v593
    %631 = vmatprep.subr.mxu0 0.0
    %632 = vmatpush1.msra.mxu0 %v594
    %633 = vmatprep.subr.mxu0 0.0
    %634 = vmatpush1.msra.mxu0 %v595
    %635 = vmatprep.subr.mxu0 0.0
    %636 = vmatpush1.msra.mxu0 0.0
    %637 = vmatprep.subr.mxu0 0.0
    %638 = vmatpush1.msra.mxu0 0.0
    %639 = vmatprep.subr.mxu0 0.0
    %640 = vmatpush1.msra.mxu0 0.0
    %641 = vmatprep.subr.mxu0 0.0
    %642 = vmatpush1.msra.mxu0 0.0
    %643 = vmatprep.subr.mxu0 0.0
    %644 = vmatpush1.msra.mxu0 0.0
    %645 = vmatprep.subr.mxu0 0.0
    %646 = vmatpush1.msra.mxu0 0.0
    %647 = vmatprep.subr.mxu0 0.0
    %648 = vmatpush1.msra.mxu0 0.0
    %649 = vmatprep.subr.mxu0 0.0
    %650 = vmatpush1.msra.mxu0 0.0
    %651 = vmatprep.subr.mxu0 0.0
    %652 = vmatpush1.msra.mxu0 0.0
    %653 = vmatprep.subr.mxu0 0.0
    %654 = vmatpush1.msra.mxu0 0.0
    %655 = vmatprep.subr.mxu0 0.0
    %656 = vmatpush1.msra.mxu0 0.0
    %657 = vmatprep.subr.mxu0 0.0
    %658 = vmatpush1.msra.mxu0 0.0
    %659 = vmatprep.subr.mxu0 0.0
    %660 = vmatpush1.msra.mxu0 0.0
    %661 = vmatprep.subr.mxu0 0.0
    %662 = vmatpush1.msra.mxu0 0.0
    %663 = vmatprep.subr.mxu0 0.0
    %664 = vmatpush1.msra.mxu0 0.0
    %665 = vmatprep.subr.mxu0 0.0
    %666 = vmatpush1.msra.mxu0 0.0
    %667 = vmatprep.mubr.f32.mxu0 0.0
    %668 = vmatmul.mubr.f32.gmra.mrb[0].mxu0 %v597
    %v669 = vpop.f32.mrb[0].mxu0
    %v670 = vadd.f32 %v601, %v669
    %v671 = vpop.f32.mrb[0].mxu0
    %672 = vdwg.mxu0
    %v673 = vtanh.pop %v670
    %s674 = scalar_lea.vmem [#allocation2], 384
    %v675 = vld [vmem:[%s674] sm:$0xff]
    %677 = vset.pattern.permute.xlu0 0
    %678 = vperm.xlu0 %677, %v675
    %v679 = vpop.permute.xlu0 %678
    %v681 = vmul.f32 %v679, %v673
    %682 = vset.pattern.permute.xlu0 1
    %683 = vperm.xlu0 %682, %v675
    %v684 = vpop.permute.xlu0 %683
    %v687 = vrot.slane %v673, 1
    %v689 = vmul.f32 %v684, %v687
    %v690 = vadd.f32 %v681, %v689
    %691 = vset.pattern.permute.xlu0 2
    %692 = vperm.xlu0 %691, %v675
    %v693 = vpop.permute.xlu0 %692
    %v695 = vrot.slane %v673, 2
    %v697 = vmul.f32 %v693, %v695
    %v698 = vadd.f32 %v690, %v697
    %699 = vset.pattern.permute.xlu0 3
    %700 = vperm.xlu0 %699, %v675
    %v701 = vpop.permute.xlu0 %700
    %v703 = vadd.f32 %v698, %v701
    %v704 = vxor.u32 %v703, 2147483648
    %v705 = vmul.f32 %v704, 1.442695
    %v706 = vpow.pop %v705
    %v707 = vadd.f32 %v706, 1.0
    %v708 = vrcp.pop %v707
    %v709 = vmul.f32 1.0, %v708
    %710 = vst [vmem:[%s2] sm:$0x1] %v709
    // Predicated region
    $region14: #{nnet_forward.1} parent=1 // pred_check
      _
    $region15: #{nnet_forward.1} parent=1 // pred_check_branch
      %712 = sbr.rel (0) target = $region17
    $region16: #{nnet_forward.1} parent=1 // pred_region
      _
    $region17: #{nnet_forward.1} parent=1 // pred_fallthru
      _
    // Predicated region
    $region18: #{nnet_forward.1} parent=1 // pred_check
      _
    $region19: #{nnet_forward.1} parent=1 // pred_check_branch
      %714 = sbr.rel (0) target = $region21
    $region20: #{nnet_forward.1} parent=1 // pred_region
      _
    $region21: #{nnet_forward.1} parent=1 // pred_fallthru
      _
    %715 = vsyncpa [#allocation3], 1

</llo_original>
